<compile_context>
chip_gen: v7x
topology: tpu7x:2x2x1
jax: 0.10.0
libtpu: 0.0.40
codegen_flags: <defaults>
</compile_context>

<pallas_src>
import math

import jax
import jax.numpy as jnp
import numpy as np
from jax.experimental import pallas as pl
from jax.experimental.pallas import tpu as pltpu


def _lcl_embed_kernel(k_ref, qc_ref, idx_ref, rsel_ref, wk_ref, bias_ref, out_ref):
    # Per (batch b, row-tile t, gather-chunk c) grid point:
    #   k_ref:    (1, tq, k_dim)       qc_ref:   (1, cn, Ep)    chunk c of this batch's qc
    #   idx_ref:  (1, tq*m, 1) int32   rsel_ref: (tq*m, tq)     precomputed broadcast one-hot
    #   wk_ref:   (k_dim, Ep)          bias_ref: (1, Ep)
    #   out_ref:  (1, tq*m, Ep)        accumulator across the chunk axis
    c = pl.program_id(2)
    tm = idx_ref.shape[1]
    cn = qc_ref.shape[1]

    # K-side fused projection + all folded biases, broadcast over the m neighbours of
    # each centre row via the precomputed one-hot (pure MXU, no per-step mask rebuild).
    @pl.when(c == 0)
    def _():
        kc = jnp.dot(k_ref[0, :, :], wk_ref[...],
                     preferred_element_type=jnp.float32) + bias_ref[...]
        out_ref[0, :, :] = jnp.dot(rsel_ref[...], kc,
                                   preferred_element_type=jnp.float32)

    # Gather Q-side rows belonging to this n-chunk with a one-hot MXU matmul; indices
    # outside [c*cn, (c+1)*cn) contribute an all-zero row and are picked up by the
    # chunk that owns them.
    idx = idx_ref[0, :, :]                                            # (tq*m, 1)
    cols = jax.lax.broadcasted_iota(jnp.int32, (tm, cn), 1) + c * cn
    qsel = jnp.where(idx == cols, 1.0, 0.0)
    out_ref[0, :, :] += jnp.dot(qsel, qc_ref[0, :, :],
                                preferred_element_type=jnp.float32)


def _pick_tile(n, target):
    """Largest t <= target with n % t == 0 and (t % 8 == 0 or t == n)."""
    if n <= target:
        return n
    t = (target // 8) * 8
    while t >= 8:
        if n % t == 0:
            return t
        t -= 8
    return n


def linear_concat_linear_embedding(k, q, nbhd_idx, wk, bk, wq, bq, wo, bo, n_heads,
                                   *, row_tile=None, gather_chunk=None):
    bs, n, k_dim = k.shape
    q_dim = q.shape[-1]
    m = nbhd_idx.shape[-1]
    embed_dim = wk.shape[0]
    d = embed_dim // n_heads
    assert d * n_heads == embed_dim

    # Lane-dense output: pad the fused output dim to a multiple of 128 so every store
    # is an unmasked full-lane vst; the zero-padded columns are sliced off afterwards.
    e_pad = max(128, ((embed_dim + 127) // 128) * 128)
    pad = e_pad - embed_dim

    # Fold fc_o (shared across heads) into the per-head projection weights/biases.
    wo_k = wo[:, :d]                      # multiplies the K half of the concat
    wo_q = wo[:, d:]                      # multiplies the (gathered) Q half
    wk_h = wk.reshape(n_heads, d, k_dim)  # wk_h[h, c, k_in]
    wq_h = wq.reshape(n_heads, d, q_dim)
    fused_wk = jnp.einsum("hck,ec->khe", wk_h, wo_k,
                          precision="highest").reshape(k_dim, embed_dim)
    fused_wq = jnp.einsum("hcq,ec->qhe", wq_h, wo_q,
                          precision="highest").reshape(q_dim, embed_dim)
    bias = (jnp.einsum("hc,ec->he", bk.reshape(n_heads, d), wo_k, precision="highest")
            + jnp.einsum("hc,ec->he", bq.reshape(n_heads, d), wo_q, precision="highest")
            + bo[None, :]).reshape(1, embed_dim)
    if pad:
        fused_wk = jnp.pad(fused_wk, ((0, 0), (0, pad)))
        fused_wq = jnp.pad(fused_wq, ((0, 0), (0, pad)))
        bias = jnp.pad(bias, ((0, 0), (0, pad)))

    # Q-side fused projection precomputed as a plain XLA batched matmul; the kernel
    # only gathers from it, so its blocks pipeline like any other input.
    qc = jnp.einsum("bnq,qe->bne", q, fused_wq, precision="highest")   # (bs, n, Ep)

    # Tiling: row tile targets a ~2 MiB lane-dense out block; gather chunk keeps the
    # one-hot contraction <= 256 columns (MXU-native width, bounded vreg/VMEM pressure).
    if row_tile is None:
        target_rows = max(8, (2 * 1024 * 1024) // (m * e_pad * 4))
        row_tile = _pick_tile(n, target_rows)
    assert n % row_tile == 0 and (row_tile == n or row_tile % 8 == 0)
    tq = row_tile
    n_tiles = n // tq
    if gather_chunk is None:
        gather_chunk = _pick_tile(n, 256)
    assert n % gather_chunk == 0 and (gather_chunk == n or gather_chunk % 8 == 0)
    cn = gather_chunk
    n_chunks = n // cn

    # Neighbour indices flattened to (bs, n*m, 1) so the kernel never reshapes vectors.
    idx_flat = nbhd_idx.reshape(bs, n * m, 1).astype(jnp.int32)

    # Static "broadcast centre row i across its m neighbours" one-hot, hoisted out of
    # the kernel: row r = i*m + j selects kc row i.  Grid-invariant input.
    rsel = jnp.repeat(jnp.eye(tq, dtype=jnp.float32), m, axis=0)       # (tq*m, tq)

    # VMEM budget: double-buffered blocks + headroom, clamped so a v7x (64 MiB physical)
    # compile never over-asks while v5e/v6e (128 MiB) still get room for big tiles.
    blk_bytes = 4 * (tq * k_dim + cn * e_pad + tq * m + tq * m * tq
                     + k_dim * e_pad + e_pad + tq * m * e_pad)
    vmem_limit = int(min(max(4 * blk_bytes + (8 << 20), 32 << 20), 100 << 20))

    out_flat = pl.pallas_call(
        _lcl_embed_kernel,
        out_shape=jax.ShapeDtypeStruct((bs, n * m, e_pad), jnp.float32),
        grid_spec=pltpu.PrefetchScalarGridSpec(
            num_scalar_prefetch=0,
            grid=(bs, n_tiles, n_chunks),
            in_specs=[
                pl.BlockSpec((1, tq, k_dim), lambda b, t, c: (b, t, 0)),
                pl.BlockSpec((1, cn, e_pad), lambda b, t, c: (b, c, 0)),
                pl.BlockSpec((1, tq * m, 1), lambda b, t, c: (b, t, 0)),
                pl.BlockSpec((tq * m, tq), lambda b, t, c: (0, 0)),
                pl.BlockSpec((k_dim, e_pad), lambda b, t, c: (0, 0)),
                pl.BlockSpec((1, e_pad), lambda b, t, c: (0, 0)),
            ],
            out_specs=pl.BlockSpec((1, tq * m, e_pad), lambda b, t, c: (b, t, 0)),
        ),
        compiler_params=pltpu.CompilerParams(
            dimension_semantics=("parallel", "parallel", "arbitrary"),
            vmem_limit_bytes=vmem_limit,
        ),
    )(k, qc, idx_flat, rsel, fused_wk, bias)

    # Strip lane padding, reshape back to the PyTorch output layout (b, n, m, h, d).
    return out_flat[:, :, :embed_dim].reshape(bs, n, m, n_heads, d)


def reference(k, q, nbhd_idx, wk, bk, wq, bq, wo, bo, n_heads):
    bs, n, _ = k.shape
    m = nbhd_idx.shape[-1]
    embed_dim = wk.shape[0]
    d = embed_dim // n_heads
    kp = (jnp.einsum("bnk,ek->bne", k, wk, precision="highest") + bk
          ).reshape(bs, n, n_heads, d)
    qp = (jnp.einsum("bnk,ek->bne", q, wq, precision="highest") + bq
          ).reshape(bs, n, n_heads, d)
    k_rep = jnp.broadcast_to(kp[:, :, None, :, :], (bs, n, m, n_heads, d))
    batch = jnp.arange(bs)[:, None, None]
    q_gat = qp[batch, nbhd_idx]                                   # (b, n, m, h, d)
    cat = jnp.concatenate([k_rep, q_gat], axis=-1)                # (b, n, m, h, 2d)
    return jnp.einsum("bnmhc,ec->bnmhe", cat, wo, precision="highest") + bo


if __name__ == "__main__":
    bs, n, m = 2, 8, 8
    k_dim, q_dim = 16, 16
    embed_dim, n_heads = 32, 4
    head_dim = embed_dim // n_heads

    key = jax.random.PRNGKey(0)
    kk, kq, kidx, kwk, kbk, kwq, kbq, kwo, kbo = jax.random.split(key, 9)

    k = jax.random.normal(kk, (bs, n, k_dim), dtype=jnp.float32)
    q = jax.random.normal(kq, (bs, n, q_dim), dtype=jnp.float32)
    nbhd_idx = jax.random.randint(kidx, (bs, n, m), 0, n, dtype=jnp.int32)

    # Deterministic nn.Linear-style init: U(-1/sqrt(fan_in), 1/sqrt(fan_in)).
    bnd_k = 1.0 / math.sqrt(k_dim)
    bnd_q = 1.0 / math.sqrt(q_dim)
    bnd_o = 1.0 / math.sqrt(2 * head_dim)
    wk = jax.random.uniform(kwk, (embed_dim, k_dim), minval=-bnd_k, maxval=bnd_k)
    bk = jax.random.uniform(kbk, (embed_dim,), minval=-bnd_k, maxval=bnd_k)
    wq = jax.random.uniform(kwq, (embed_dim, q_dim), minval=-bnd_q, maxval=bnd_q)
    bq = jax.random.uniform(kbq, (embed_dim,), minval=-bnd_q, maxval=bnd_q)
    wo = jax.random.uniform(kwo, (head_dim, 2 * head_dim), minval=-bnd_o, maxval=bnd_o)
    bo = jax.random.uniform(kbo, (head_dim,), minval=-bnd_o, maxval=bnd_o)

    out = linear_concat_linear_embedding(k, q, nbhd_idx, wk, bk, wq, bq, wo, bo, n_heads)
    out = jax.block_until_ready(out)

    ref = reference(k, q, nbhd_idx, wk, bk, wq, bq, wo, bo, n_heads)
    assert out.shape == (bs, n, m, n_heads, head_dim)
    np.testing.assert_allclose(np.asarray(out), np.asarray(ref), rtol=1e-4, atol=1e-5)
    print("KERNEL_OK")
</pallas_src>

<mosaic_0001>
module attributes {stable_mosaic.version = 11 : i64} {
  func.func @_lcl_embed_kernel(%arg0: i32, %arg1: i32, %arg2: i32, %arg3: memref<1x8x16xf32, #tpu.memory_space<vmem>>, %arg4: memref<1x8x128xf32, #tpu.memory_space<vmem>>, %arg5: memref<1x64x1xi32, #tpu.memory_space<vmem>>, %arg6: memref<64x8xf32, #tpu.memory_space<vmem>>, %arg7: memref<16x128xf32, #tpu.memory_space<vmem>>, %arg8: memref<1x128xf32, #tpu.memory_space<vmem>>, %arg9: memref<1x64x128xf32, #tpu.memory_space<vmem>>) attributes {dimension_semantics = [#tpu.dimension_semantics<parallel>, #tpu.dimension_semantics<parallel>, #tpu.dimension_semantics<arbitrary>], iteration_bounds = array<i64: 2, 1, 1>, scalar_prefetch = 0 : i64, scratch_operands = 0 : i64, tpu.core_type = #tpu.core_type<tc>, window_params = [{transform_indices = @transform_0, window_bounds = array<i64: 1, 8, 16>}, {transform_indices = @transform_1, window_bounds = array<i64: 1, 8, 128>}, {transform_indices = @transform_2, window_bounds = array<i64: 1, 64, 1>}, {pipeline_mode = #tpu.pipeline_mode<synchronous>, transform_indices = @transform_3, window_bounds = array<i64: 64, 8>}, {pipeline_mode = #tpu.pipeline_mode<synchronous>, transform_indices = @transform_4, window_bounds = array<i64: 16, 128>}, {pipeline_mode = #tpu.pipeline_mode<synchronous>, transform_indices = @transform_5, window_bounds = array<i64: 1, 128>}, {transform_indices = @transform_6, window_bounds = array<i64: 1, 64, 128>}]} {
    %c0_i32 = arith.constant 0 : i32
    %0 = arith.cmpi eq, %arg2, %c0_i32 : i32
    %1 = arith.extui %0 : i1 to i32
    %c0_i32_0 = arith.constant 0 : i32
    %2 = arith.cmpi ne, %1, %c0_i32_0 : i32
    scf.if %2 {
      %c0_14 = arith.constant 0 : index
      %c0_15 = arith.constant 0 : index
      %c0_16 = arith.constant 0 : index
      %23 = vector.load %arg3[%c0_14, %c0_15, %c0_16] : memref<1x8x16xf32, #tpu.memory_space<vmem>>, vector<1x8x16xf32>
      %24 = vector.shape_cast %23 : vector<1x8x16xf32> to vector<8x16xf32>
      %c0_17 = arith.constant 0 : index
      %c0_18 = arith.constant 0 : index
      %25 = vector.load %arg7[%c0_17, %c0_18] : memref<16x128xf32, #tpu.memory_space<vmem>>, vector<16x128xf32>
      %cst_19 = arith.constant dense<0.000000e+00> : vector<8x128xf32>
      %26 = tpu.matmul %24, %25, %cst_19 {dimension_numbers = #tpu.dot_dimension_numbers<[1], [0], [0], [1], [0, 0, 1, 1], [], []>} : vector<8x16xf32>, vector<16x128xf32>, vector<8x128xf32> -> vector<8x128xf32>
      %c0_20 = arith.constant 0 : index
      %c0_21 = arith.constant 0 : index
      %27 = vector.load %arg8[%c0_20, %c0_21] : memref<1x128xf32, #tpu.memory_space<vmem>>, vector<1x128xf32>
      %28 = vector.broadcast %27 : vector<1x128xf32> to vector<8x128xf32>
      %29 = arith.addf %26, %28 : vector<8x128xf32>
      %c0_22 = arith.constant 0 : index
      %c0_23 = arith.constant 0 : index
      %30 = vector.load %arg6[%c0_22, %c0_23] : memref<64x8xf32, #tpu.memory_space<vmem>>, vector<64x8xf32>
      %cst_24 = arith.constant dense<0.000000e+00> : vector<64x128xf32>
      %31 = tpu.matmul %30, %29, %cst_24 {dimension_numbers = #tpu.dot_dimension_numbers<[1], [0], [0], [1], [0, 0, 1, 1], [], []>} : vector<64x8xf32>, vector<8x128xf32>, vector<64x128xf32> -> vector<64x128xf32>
      %c0_25 = arith.constant 0 : index
      %c0_26 = arith.constant 0 : index
      %c0_27 = arith.constant 0 : index
      %32 = vector.load %arg9[%c0_25, %c0_26, %c0_27] : memref<1x64x128xf32, #tpu.memory_space<vmem>>, vector<1x64x128xf32>
      %33 = vector.shape_cast %32 : vector<1x64x128xf32> to vector<64x128xf32>
      %34 = vector.shape_cast %31 : vector<64x128xf32> to vector<1x64x128xf32>
      tpu.vector_store %arg9[%c0_25, %c0_26, %c0_27], %34 {strides = array<i32>} : memref<1x64x128xf32, #tpu.memory_space<vmem>>, vector<1x64x128xf32>,
    } else {
    }
    %c0 = arith.constant 0 : index
    %c0_1 = arith.constant 0 : index
    %c0_2 = arith.constant 0 : index
    %3 = vector.load %arg5[%c0, %c0_1, %c0_2] : memref<1x64x1xi32, #tpu.memory_space<vmem>>, vector<1x64x1xi32>
    %4 = vector.shape_cast %3 : vector<1x64x1xi32> to vector<64x1xi32>
    %5 = tpu.iota {dimensions = array<i32: 1>} : vector<64x8xi32>
    %c8_i32 = arith.constant 8 : i32
    %6 = arith.muli %arg2, %c8_i32 : i32
    %7 = vector.broadcast %6 : i32 to vector<64x8xi32>
    %8 = arith.addi %5, %7 : vector<64x8xi32>
    %9 = vector.broadcast %4 : vector<64x1xi32> to vector<64x8xi32>
    %10 = arith.cmpi eq, %9, %8 : vector<64x8xi32>
    %cst = arith.constant 1.000000e+00 : f32
    %cst_3 = arith.constant 0.000000e+00 : f32
    %11 = vector.broadcast %cst : f32 to vector<64x8xf32>
    %12 = vector.broadcast %cst_3 : f32 to vector<64x8xf32>
    %13 = arith.select %10, %11, %12 : vector<64x8xi1>, vector<64x8xf32>
    %c0_4 = arith.constant 0 : index
    %c0_5 = arith.constant 0 : index
    %c0_6 = arith.constant 0 : index
    %14 = vector.load %arg9[%c0_4, %c0_5, %c0_6] : memref<1x64x128xf32, #tpu.memory_space<vmem>>, vector<1x64x128xf32>
    %15 = vector.shape_cast %14 : vector<1x64x128xf32> to vector<64x128xf32>
    %c0_7 = arith.constant 0 : index
    %c0_8 = arith.constant 0 : index
    %c0_9 = arith.constant 0 : index
    %16 = vector.load %arg4[%c0_7, %c0_8, %c0_9] : memref<1x8x128xf32, #tpu.memory_space<vmem>>, vector<1x8x128xf32>
    %17 = vector.shape_cast %16 : vector<1x8x128xf32> to vector<8x128xf32>
    %cst_10 = arith.constant dense<0.000000e+00> : vector<64x128xf32>
    %18 = tpu.matmul %13, %17, %cst_10 {dimension_numbers = #tpu.dot_dimension_numbers<[1], [0], [0], [1], [0, 0, 1, 1], [], []>} : vector<64x8xf32>, vector<8x128xf32>, vector<64x128xf32> -> vector<64x128xf32>
    %19 = arith.addf %15, %18 : vector<64x128xf32>
    %c0_11 = arith.constant 0 : index
    %c0_12 = arith.constant 0 : index
    %c0_13 = arith.constant 0 : index
    %20 = vector.load %arg9[%c0_11, %c0_12, %c0_13] : memref<1x64x128xf32, #tpu.memory_space<vmem>>, vector<1x64x128xf32>
    %21 = vector.shape_cast %20 : vector<1x64x128xf32> to vector<64x128xf32>
    %22 = vector.shape_cast %19 : vector<64x128xf32> to vector<1x64x128xf32>
    tpu.vector_store %arg9[%c0_11, %c0_12, %c0_13], %22 {strides = array<i32>} : memref<1x64x128xf32, #tpu.memory_space<vmem>>, vector<1x64x128xf32>,
    return
  }
  func.func @transform_0(%arg0: i32, %arg1: i32, %arg2: i32) -> (i32, i32, i32) {
    %c0_i32 = arith.constant 0 : i32
    %c0_i32_0 = arith.constant 0 : i32
    return %arg0, %arg1, %c0_i32 : i32, i32, i32
  }
  func.func @transform_1(%arg0: i32, %arg1: i32, %arg2: i32) -> (i32, i32, i32) {
    %c0_i32 = arith.constant 0 : i32
    %c0_i32_0 = arith.constant 0 : i32
    return %arg0, %arg2, %c0_i32 : i32, i32, i32
  }
  func.func @transform_2(%arg0: i32, %arg1: i32, %arg2: i32) -> (i32, i32, i32) {
    %c0_i32 = arith.constant 0 : i32
    %c0_i32_0 = arith.constant 0 : i32
    return %arg0, %arg1, %c0_i32 : i32, i32, i32
  }
  func.func @transform_3(%arg0: i32, %arg1: i32, %arg2: i32) -> (i32, i32) {
    %c0_i32 = arith.constant 0 : i32
    %c0_i32_0 = arith.constant 0 : i32
    %c0_i32_1 = arith.constant 0 : i32
    return %c0_i32, %c0_i32_0 : i32, i32
  }
  func.func @transform_4(%arg0: i32, %arg1: i32, %arg2: i32) -> (i32, i32) {
    %c0_i32 = arith.constant 0 : i32
    %c0_i32_0 = arith.constant 0 : i32
    %c0_i32_1 = arith.constant 0 : i32
    return %c0_i32, %c0_i32_0 : i32, i32
  }
  func.func @transform_5(%arg0: i32, %arg1: i32, %arg2: i32) -> (i32, i32) {
    %c0_i32 = arith.constant 0 : i32
    %c0_i32_0 = arith.constant 0 : i32
    %c0_i32_1 = arith.constant 0 : i32
    return %c0_i32, %c0_i32_0 : i32, i32
  }
  func.func @transform_6(%arg0: i32, %arg1: i32, %arg2: i32) -> (i32, i32, i32) {
    %c0_i32 = arith.constant 0 : i32
    %c0_i32_0 = arith.constant 0 : i32
    return %arg0, %arg1, %c0_i32 : i32, i32, i32
  }
}

</mosaic_0001>

<llo_original>
// kernel: tpu_custom_call.1
$region0: #{tpu_custom_call.1}
  #allocation0 [shape = 'u32[]', space=smem, size = 0x4, offset = 0x4, fixed_abs, tag = 'smem constant byte address 0x4 - core index']
  #allocation1 [shape = 'u32[144,128]{1,0:T(1,128)}', space=vmem, size = 0x12000, scoped, tag = 'internal scratch']
  %s0 = inlined_call_operand.vmem [shape: f32[2,8,16], index: 0, kind: input, shape index: {}]
  %s1 = inlined_call_operand.vmem [shape: f32[2,8,128], index: 1, kind: input, shape index: {}]
  %s2 = inlined_call_operand.vmem [shape: s32[2,64,1], index: 2, kind: input, shape index: {}]
  %s3 = inlined_call_operand.vmem [shape: f32[64,8], index: 3, kind: input, shape index: {}]
  %s4 = inlined_call_operand.vmem [shape: f32[16,128], index: 4, kind: input, shape index: {}]
  %s5 = inlined_call_operand.vmem [shape: f32[1,128], index: 5, kind: input, shape index: {}]
  %s6 = inlined_call_operand.hbm [shape: f32[2,64,128], index: 6, kind: output, shape index: {}]
  %s7 = sld [smem:[#allocation0]]
  $region61: #{tpu_custom_call.1} parent=0
    _
  %s9 = ssub.s32 1, %s7
  %s10 = scalar_select 0, %s9, %s7
  $region1: #{tpu_custom_call.1} parent=0
    #allocation2 [shape = 'u8[65536]{0}', space=vmem, size = 0x10000, scoped, tag = 'output window, operand 0']
    #allocation3 [shape = 's32[2]{0}', space=sflag, size = 0x8, scoped, tag = 'scoped memory for tpu_custom_call.1']
    %11 = vsyncpa [#allocation3], 0
    %s12 = scalar_lea.sflag [#allocation3], 1
    %13 = vsyncpa %s12, 0
    loop: start=0, step=1, limit=4
    $region2: #{tpu_custom_call.1} parent=1 // loop_pre_header
      _
    $region3: #{tpu_custom_call.1} parent=1 // loop_header
      %s15 = sphi 0, %s19
      %p16 = scmp.ge.s32.totalorder %s15, 4
      %s22 = sphi 0, %s41
      %s23 = sphi 0, %s37
      %s24 = sphi 0, %s33
      %s25 = sphi 0, %s22
      %s26 = sphi 0, %s23
      %s27 = sphi 0, %s24
      %s28 = sphi 0, %s25
      %s29 = sphi 0, %s26
      %s30 = sphi 0, %s27
      %s46 = sphi 0, %s48
      %s49 = sphi 0, %s46
      %s50 = sphi 0, %s49
      %s66 = sphi 0, %s50
      %s74 = sphi 0, %s76
      %s77 = sphi 0, %s74
      %s78 = sphi 0, %s77
      %s94 = sphi 0, %s78
      %s102 = sphi 0, %s104
      %s105 = sphi 0, %s102
      %s106 = sphi 0, %s105
      %s122 = sphi 0, %s106
      %s126 = sphi 0, %s126
      %s128 = sphi 0, %s126
      %s129 = sphi 0, %s128
      %s143 = sphi 0, %s129
      %s147 = sphi 0, %s147
      %s149 = sphi 0, %s147
      %s150 = sphi 0, %s149
      %s164 = sphi 0, %s150
      %s168 = sphi 0, %s168
      %s170 = sphi 0, %s168
      %s171 = sphi 0, %s170
      %s185 = sphi 0, %s171
      %s193 = sphi 0, %s195
      %s196 = sphi 0, %s193
      %s197 = sphi 0, %s196
      %s213 = sphi 0, %s197
    $region4: #{tpu_custom_call.1} parent=1 // loop_header_branch
      %18 = sbr.rel (%p16) target = $region8
    $region5: #{tpu_custom_call.1} parent=1 // loop_body
      %s20 = ssub.s32 %s15, 1
      %s21 = ssub.s32 %s15, 2
      %s31 = sadd.s32 1, %s24
      %p32 = scmp.ge.s32.totalorder %s31, 1
      %s33 = scalar_select %p32, 0, %s31
      %s34 = sadd.s32 1, %s23
      %s35 = scalar_select %p32, %s34, %s23
      %p36 = scmp.ge.s32.totalorder %s35, 1
      %s37 = scalar_select %p36, 0, %s35
      %s38 = sadd.s32 1, %s22
      %s39 = scalar_select %p36, %s38, %s22
      %p40 = scmp.ge.s32.totalorder %s39, 2
      %s41 = scalar_select %p40, 0, %s39
      %s42 = ssub.s32 %s22, %s41
      %s43 = ssub.s32 %s23, %s37
      %s44 = sor.u32 %s42, %s43
      %p45 = scmp.eq.s32.totalorder %s44, 0
      %s47 = sadd.s32 %s46, 1
      %s48 = scalar_select %p45, %s46, %s47
      %p51 = pneg %p45
      %p52 = scmp.eq.s32.totalorder %s15, 1
      %p53 = por %p51, %p52
      %p54 = scmp.ne.s32.totalorder %s46, %s49
      %p55 = scmp.eq.s32.totalorder %s15, 0
      %p56 = por %p54, %p55
      %p57 = scmp.ne.s32.totalorder %s46, %s49
      %p58 = scmp.eq.s32.totalorder %s20, 1
      %p59 = por %p57, %p58
      %p60 = scmp.ne.s32.totalorder %s49, %s50
      %p61 = scmp.eq.s32.totalorder %s20, 0
      %p62 = por %p60, %p61
      %p63 = scmp.ne.s32.totalorder %s49, %s50
      %p64 = scmp.eq.s32.totalorder %s21, 1
      %p65 = por %p63, %p64
      %p67 = scmp.ne.s32.totalorder %s50, %s66
      %p68 = scmp.eq.s32.totalorder %s21, 0
      %p69 = por %p67, %p68
      %s70 = ssub.s32 %s22, %s41
      %s71 = ssub.s32 %s24, %s33
      %s72 = sor.u32 %s70, %s71
      %p73 = scmp.eq.s32.totalorder %s72, 0
      %s75 = sadd.s32 %s74, 1
      %s76 = scalar_select %p73, %s74, %s75
      %p79 = pneg %p73
      %p80 = scmp.eq.s32.totalorder %s15, 1
      %p81 = por %p79, %p80
      %p82 = scmp.ne.s32.totalorder %s74, %s77
      %p83 = scmp.eq.s32.totalorder %s15, 0
      %p84 = por %p82, %p83
      %p85 = scmp.ne.s32.totalorder %s74, %s77
      %p86 = scmp.eq.s32.totalorder %s20, 1
      %p87 = por %p85, %p86
      %p88 = scmp.ne.s32.totalorder %s77, %s78
      %p89 = scmp.eq.s32.totalorder %s20, 0
      %p90 = por %p88, %p89
      %p91 = scmp.ne.s32.totalorder %s77, %s78
      %p92 = scmp.eq.s32.totalorder %s21, 1
      %p93 = por %p91, %p92
      %p95 = scmp.ne.s32.totalorder %s78, %s94
      %p96 = scmp.eq.s32.totalorder %s21, 0
      %p97 = por %p95, %p96
      %s98 = ssub.s32 %s22, %s41
      %s99 = ssub.s32 %s23, %s37
      %s100 = sor.u32 %s98, %s99
      %p101 = scmp.eq.s32.totalorder %s100, 0
      %s103 = sadd.s32 %s102, 1
      %s104 = scalar_select %p101, %s102, %s103
      %p107 = pneg %p101
      %p108 = scmp.eq.s32.totalorder %s15, 1
      %p109 = por %p107, %p108
      %p110 = scmp.ne.s32.totalorder %s102, %s105
      %p111 = scmp.eq.s32.totalorder %s15, 0
      %p112 = por %p110, %p111
      %p113 = scmp.ne.s32.totalorder %s102, %s105
      %p114 = scmp.eq.s32.totalorder %s20, 1
      %p115 = por %p113, %p114
      %p116 = scmp.ne.s32.totalorder %s105, %s106
      %p117 = scmp.eq.s32.totalorder %s20, 0
      %p118 = por %p116, %p117
      %p119 = scmp.ne.s32.totalorder %s105, %s106
      %p120 = scmp.eq.s32.totalorder %s21, 1
      %p121 = por %p119, %p120
      %p123 = scmp.ne.s32.totalorder %s106, %s122
      %p124 = scmp.eq.s32.totalorder %s21, 0
      %p125 = por %p123, %p124
      %s127 = sadd.s32 %s126, 1
      %p130 = scmp.eq.s32.totalorder %s15, 1
      %p131 = scmp.ne.s32.totalorder %s126, %s128
      %p132 = scmp.eq.s32.totalorder %s15, 0
      %p133 = por %p131, %p132
      %p134 = scmp.ne.s32.totalorder %s126, %s128
      %p135 = scmp.eq.s32.totalorder %s20, 1
      %p136 = por %p134, %p135
      %p137 = scmp.ne.s32.totalorder %s128, %s129
      %p138 = scmp.eq.s32.totalorder %s20, 0
      %p139 = por %p137, %p138
      %p140 = scmp.ne.s32.totalorder %s128, %s129
      %p141 = scmp.eq.s32.totalorder %s21, 1
      %p142 = por %p140, %p141
      %p144 = scmp.ne.s32.totalorder %s129, %s143
      %p145 = scmp.eq.s32.totalorder %s21, 0
      %p146 = por %p144, %p145
      %s148 = sadd.s32 %s147, 1
      %p151 = scmp.eq.s32.totalorder %s15, 1
      %p152 = scmp.ne.s32.totalorder %s147, %s149
      %p153 = scmp.eq.s32.totalorder %s15, 0
      %p154 = por %p152, %p153
      %p155 = scmp.ne.s32.totalorder %s147, %s149
      %p156 = scmp.eq.s32.totalorder %s20, 1
      %p157 = por %p155, %p156
      %p158 = scmp.ne.s32.totalorder %s149, %s150
      %p159 = scmp.eq.s32.totalorder %s20, 0
      %p160 = por %p158, %p159
      %p161 = scmp.ne.s32.totalorder %s149, %s150
      %p162 = scmp.eq.s32.totalorder %s21, 1
      %p163 = por %p161, %p162
      %p165 = scmp.ne.s32.totalorder %s150, %s164
      %p166 = scmp.eq.s32.totalorder %s21, 0
      %p167 = por %p165, %p166
      %s169 = sadd.s32 %s168, 1
      %p172 = scmp.eq.s32.totalorder %s15, 1
      %p173 = scmp.ne.s32.totalorder %s168, %s170
      %p174 = scmp.eq.s32.totalorder %s15, 0
      %p175 = por %p173, %p174
      %p176 = scmp.ne.s32.totalorder %s168, %s170
      %p177 = scmp.eq.s32.totalorder %s20, 1
      %p178 = por %p176, %p177
      %p179 = scmp.ne.s32.totalorder %s170, %s171
      %p180 = scmp.eq.s32.totalorder %s20, 0
      %p181 = por %p179, %p180
      %p182 = scmp.ne.s32.totalorder %s170, %s171
      %p183 = scmp.eq.s32.totalorder %s21, 1
      %p184 = por %p182, %p183
      %p186 = scmp.ne.s32.totalorder %s171, %s185
      %p187 = scmp.eq.s32.totalorder %s21, 0
      %p188 = por %p186, %p187
      %s189 = ssub.s32 %s22, %s41
      %s190 = ssub.s32 %s23, %s37
      %s191 = sor.u32 %s189, %s190
      %p192 = scmp.eq.s32.totalorder %s191, 0
      %s194 = sadd.s32 %s193, 1
      %s195 = scalar_select %p192, %s193, %s194
      %p198 = pneg %p192
      %p199 = scmp.eq.s32.totalorder %s15, 1
      %p200 = por %p198, %p199
      %p201 = scmp.ne.s32.totalorder %s193, %s196
      %p202 = scmp.eq.s32.totalorder %s15, 0
      %p203 = por %p201, %p202
      %p204 = scmp.ne.s32.totalorder %s193, %s196
      %p205 = scmp.eq.s32.totalorder %s20, 1
      %p206 = por %p204, %p205
      %p207 = scmp.ne.s32.totalorder %s196, %s197
      %p208 = scmp.eq.s32.totalorder %s20, 0
      %p209 = por %p207, %p208
      %p210 = scmp.ne.s32.totalorder %s196, %s197
      %p211 = scmp.eq.s32.totalorder %s21, 1
      %p212 = por %p210, %p211
      %p214 = scmp.ne.s32.totalorder %s197, %s213
      %p215 = scmp.eq.s32.totalorder %s21, 0
      %p216 = por %p214, %p215
      %p217 = scmp.le.s32.totalorder 1, %s15
      %p218 = scmp.lt.s32.totalorder %s15, 3
      %p219 = pnand %p217, %p218
      %p220 = pneg %p219
      // Predicated region
      $region9: #{tpu_custom_call.1} parent=5 // pred_check
        _
      $region10: #{tpu_custom_call.1} parent=5 // pred_check_branch
        %222 = sbr.rel (%p219) target = $region12
      $region11: #{tpu_custom_call.1} parent=5 // pred_region
        %s223 = ssub.s32 %s15, 1
        // Predicated region
        $region13: #{tpu_custom_call.1} parent=11 // pred_check
          %p224 = pneg %p139
        $region14: #{tpu_custom_call.1} parent=11 // pred_check_branch
          %226 = sbr.rel (%p224) target = $region16
        $region15: #{tpu_custom_call.1} parent=11 // pred_region
          _
        $region16: #{tpu_custom_call.1} parent=11 // pred_fallthru
          _
        // Predicated region
        $region17: #{tpu_custom_call.1} parent=11 // pred_check
          %p227 = pneg %p160
        $region18: #{tpu_custom_call.1} parent=11 // pred_check_branch
          %229 = sbr.rel (%p227) target = $region20
        $region19: #{tpu_custom_call.1} parent=11 // pred_region
          _
        $region20: #{tpu_custom_call.1} parent=11 // pred_fallthru
          _
        // Predicated region
        $region21: #{tpu_custom_call.1} parent=11 // pred_check
          %p230 = pneg %p181
        $region22: #{tpu_custom_call.1} parent=11 // pred_check_branch
          %232 = sbr.rel (%p230) target = $region24
        $region23: #{tpu_custom_call.1} parent=11 // pred_region
          _
        $region24: #{tpu_custom_call.1} parent=11 // pred_fallthru
          _
      $region12: #{tpu_custom_call.1} parent=5 // pred_fallthru
        _
      %p233 = scmp.lt.s32.totalorder %s15, 2
      // Predicated region
      $region25: #{tpu_custom_call.1} parent=5 // pred_check
        %p234 = pneg %p233
      $region26: #{tpu_custom_call.1} parent=5 // pred_check_branch
        %236 = sbr.rel (%p234) target = $region28
      $region27: #{tpu_custom_call.1} parent=5 // pred_region
        // Predicated region
        $region29: #{tpu_custom_call.1} parent=27 // pred_check
          %p237 = pneg %p56
        $region30: #{tpu_custom_call.1} parent=27 // pred_check_branch
          %239 = sbr.rel (%p237) target = $region32
        $region31: #{tpu_custom_call.1} parent=27 // pred_region
          %p240 = scmp.lt.s32.totalorder %s22, 1
          %s241 = scalar_select %p240, %s22, 1
          %p242 = scmp.lt.s32.totalorder %s23, 0
          %s243 = scalar_select %p242, %s23, 0
          %s244 = sadd.s32 %s243, %s241
          %s245 = smul.addr %s244, 8
          %s246 = scalar_lea.vmem %s0, %s245
        $region32: #{tpu_custom_call.1} parent=27 // pred_fallthru
          _
        // Predicated region
        $region33: #{tpu_custom_call.1} parent=27 // pred_check
          %p247 = pneg %p84
        $region34: #{tpu_custom_call.1} parent=27 // pred_check_branch
          %249 = sbr.rel (%p247) target = $region36
        $region35: #{tpu_custom_call.1} parent=27 // pred_region
          %p250 = scmp.lt.s32.totalorder %s22, 1
          %s251 = scalar_select %p250, %s22, 1
          %p252 = scmp.lt.s32.totalorder %s24, 0
          %s253 = scalar_select %p252, %s24, 0
          %s254 = sadd.s32 %s253, %s251
          %s255 = smul.addr %s254, 8
          %s256 = scalar_lea.vmem %s1, %s255
        $region36: #{tpu_custom_call.1} parent=27 // pred_fallthru
          _
        // Predicated region
        $region37: #{tpu_custom_call.1} parent=27 // pred_check
          %p257 = pneg %p112
        $region38: #{tpu_custom_call.1} parent=27 // pred_check_branch
          %259 = sbr.rel (%p257) target = $region40
        $region39: #{tpu_custom_call.1} parent=27 // pred_region
          %s260 = smul.u32 8, %s23
          %p261 = scmp.lt.s32.totalorder %s22, 1
          %s262 = scalar_select %p261, %s22, 1
          %p263 = scmp.lt.s32.totalorder %s260, 7
          %s264 = scalar_select %p263, %s260, 7
          %s265 = smul.addr %s262, 8
          %s266 = sadd.s32 %s264, %s265
          %s267 = smul.addr %s266, 8
          %s268 = scalar_lea.vmem %s2, %s267
          %s269 = smul.u32 8, %s23
        $region40: #{tpu_custom_call.1} parent=27 // pred_fallthru
          _
      $region28: #{tpu_custom_call.1} parent=5 // pred_fallthru
        _
      %p270 = scmp.le.s32.totalorder 1, %s15
      %p271 = scmp.lt.s32.totalorder %s15, 3
      %p272 = pnand %p270, %p271
      %p273 = pneg %p272
      // Predicated region
      $region41: #{tpu_custom_call.1} parent=5 // pred_check
        _
      $region42: #{tpu_custom_call.1} parent=5 // pred_check_branch
        %275 = sbr.rel (%p272) target = $region44
      $region43: #{tpu_custom_call.1} parent=5 // pred_region
        %s276 = ssub.s32 %s15, 1
        %p277 = scmp.lt.s32.totalorder %s25, 1
        %s278 = scalar_select %p277, %s25, 1
        %p279 = scmp.lt.s32.totalorder %s26, 0
        %s280 = scalar_select %p279, %s26, 0
        %s281 = sadd.s32 %s280, %s278
        %s282 = smul.addr %s281, 8
        %s283 = scalar_lea.vmem %s0, %s282
        %p284 = pneg %p62
        %p285 = pneg %p59
        %p286 = scmp.lt.s32.totalorder %s25, 1
        %s287 = scalar_select %p286, %s25, 1
        %p288 = scmp.lt.s32.totalorder %s27, 0
        %s289 = scalar_select %p288, %s27, 0
        %s290 = sadd.s32 %s289, %s287
        %s291 = smul.addr %s290, 8
        %s292 = scalar_lea.vmem %s1, %s291
        %p293 = pneg %p90
        %p294 = pneg %p87
        %s295 = smul.u32 8, %s26
        %p296 = scmp.lt.s32.totalorder %s25, 1
        %s297 = scalar_select %p296, %s25, 1
        %p298 = scmp.lt.s32.totalorder %s295, 7
        %s299 = scalar_select %p298, %s295, 7
        %s300 = smul.addr %s297, 8
        %s301 = sadd.s32 %s299, %s300
        %s302 = smul.addr %s301, 8
        %s303 = scalar_lea.vmem %s2, %s302
        %p304 = pneg %p118
        %p305 = pneg %p115
        %p306 = pneg %p139
        %p307 = pneg %p136
        %p308 = pneg %p160
        %p309 = pneg %p157
        %p310 = pneg %p181
        %p311 = pneg %p178
        %p312 = pneg %p209
        %p313 = pneg %p206
        %s314 = sand.u32 %s196, 1
        %s315 = scalar_lea.sflag [#allocation3], %s314
        %s316 = sand.u32 %s196, 1
        %s317 = smul.addr %s316, 64
        %s318 = scalar_lea.vmem [#allocation2], %s317
        %p319 = scmp.lt.s32.totalorder %s25, 1
        %s320 = scalar_select %p319, %s25, 1
        %p321 = scmp.lt.s32.totalorder %s26, 0
        %s322 = scalar_select %p321, %s26, 0
        %s323 = sadd.s32 %s322, %s320
        %s324 = smul.addr %s323, 8
        %s325 = scalar_lea.vmem %s0, %s324
        %p326 = scmp.lt.s32.totalorder %s25, 1
        %s327 = scalar_select %p326, %s25, 1
        %p328 = scmp.lt.s32.totalorder %s27, 0
        %s329 = scalar_select %p328, %s27, 0
        %s330 = sadd.s32 %s329, %s327
        %s331 = smul.addr %s330, 8
        %s332 = scalar_lea.vmem %s1, %s331
        %s333 = smul.u32 8, %s26
        %p334 = scmp.lt.s32.totalorder %s25, 1
        %s335 = scalar_select %p334, %s25, 1
        %p336 = scmp.lt.s32.totalorder %s333, 7
        %s337 = scalar_select %p336, %s333, 7
        %s338 = smul.addr %s335, 8
        %s339 = sadd.s32 %s337, %s338
        %s340 = smul.addr %s339, 8
        %s341 = scalar_lea.vmem %s2, %s340
        %s342 = smul.u32 8, %s26
        %s343 = smul.u32 8, %s26
        %p344 = scmp.eq.s32.totalorder %s27, 0
        // Predicated region
        $region45: #{tpu_custom_call.1} parent=43 // pred_check
          %p345 = pneg %p344
        $region46: #{tpu_custom_call.1} parent=43 // pred_check_branch
          %347 = sbr.rel (%p345) target = $region48
        $region47: #{tpu_custom_call.1} parent=43 // pred_region
          %v348 = vld [vmem:[%s325] sm:$0xff]
          %v349 = vld [vmem:[%s4] sm:$0xff]
          %v350 = vld [vmem:[%s4 + $0x8] sm:$0xff]
          %v351 = vld [vmem:[%s5] sm:$0x1]
          %v353 = vlaneseq
          %v354 = vshrl.u32 %v353, 7
          %v355 = vsub.s32 0, %v354
          %v356 = vrot.slane %v351, %v355
          %vm358 = vcmask 130048
          %v360 = vsel %vm358, %v348, 0
          %362 = vmatprep.subr.mxu0 0.0
          %363 = vmatpush1.msra.mxu0 %v349
          %364 = vmatprep.subr.mxu0 0.0
          %365 = vmatpush1.msra.mxu0 %v350
          %366 = vmatprep.subr.mxu0 0.0
          %367 = vmatpush1.msra.mxu0 0.0
          %368 = vmatprep.subr.mxu0 0.0
          %369 = vmatpush1.msra.mxu0 0.0
          %370 = vmatprep.subr.mxu0 0.0
          %371 = vmatpush1.msra.mxu0 0.0
          %372 = vmatprep.subr.mxu0 0.0
          %373 = vmatpush1.msra.mxu0 0.0
          %374 = vmatprep.subr.mxu0 0.0
          %375 = vmatpush1.msra.mxu0 0.0
          %376 = vmatprep.subr.mxu0 0.0
          %377 = vmatpush1.msra.mxu0 0.0
          %378 = vmatprep.subr.mxu0 0.0
          %379 = vmatpush1.msra.mxu0 0.0
          %380 = vmatprep.subr.mxu0 0.0
          %381 = vmatpush1.msra.mxu0 0.0
          %382 = vmatprep.subr.mxu0 0.0
          %383 = vmatpush1.msra.mxu0 0.0
          %384 = vmatprep.subr.mxu0 0.0
          %385 = vmatpush1.msra.mxu0 0.0
          %386 = vmatprep.subr.mxu0 0.0
          %387 = vmatpush1.msra.mxu0 0.0
          %388 = vmatprep.subr.mxu0 0.0
          %389 = vmatpush1.msra.mxu0 0.0
          %390 = vmatprep.subr.mxu0 0.0
          %391 = vmatpush1.msra.mxu0 0.0
          %392 = vmatprep.subr.mxu0 0.0
          %393 = vmatpush1.msra.mxu0 0.0
          %394 = vmatprep.subr.mxu0 0.0
          %395 = vmatpush1.msra.mxu0 0.0
          %396 = vmatprep.subr.mxu0 0.0
          %397 = vmatpush1.msra.mxu0 0.0
          %398 = vmatprep.subr.mxu0 0.0
          %399 = vmatpush1.msra.mxu0 0.0
          %400 = vmatprep.subr.mxu0 0.0
          %401 = vmatpush1.msra.mxu0 0.0
          %402 = vmatprep.subr.mxu0 0.0
          %403 = vmatpush1.msra.mxu0 0.0
          %404 = vmatprep.subr.mxu0 0.0
          %405 = vmatpush1.msra.mxu0 0.0
          %406 = vmatprep.subr.mxu0 0.0
          %407 = vmatpush1.msra.mxu0 0.0
          %408 = vmatprep.subr.mxu0 0.0
          %409 = vmatpush1.msra.mxu0 0.0
          %410 = vmatprep.subr.mxu0 0.0
          %411 = vmatpush1.msra.mxu0 0.0
          %412 = vmatprep.subr.mxu0 0.0
          %413 = vmatpush1.msra.mxu0 0.0
          %414 = vmatprep.subr.mxu0 0.0
          %415 = vmatpush1.msra.mxu0 0.0
          %416 = vmatprep.subr.mxu0 0.0
          %417 = vmatpush1.msra.mxu0 0.0
          %418 = vmatprep.subr.mxu0 0.0
          %419 = vmatpush1.msra.mxu0 0.0
          %420 = vmatprep.subr.mxu0 0.0
          %421 = vmatpush1.msra.mxu0 0.0
          %422 = vmatprep.subr.mxu0 0.0
          %423 = vmatpush1.msra.mxu0 0.0
          %424 = vmatprep.subr.mxu0 0.0
          %425 = vmatpush1.msra.mxu0 0.0
          %426 = vmatprep.mubr.f32.mxu0 0.0
          %427 = vmatmul.mubr.f32.gmra.mrb[0].mxu0 %v360
          %v428 = vpop.f32.mrb[0].mxu0
          %v429 = vadd.f32 %v356, %v428
          %v430 = vpop.f32.mrb[0].mxu0
          %431 = vdwg.mxu0
          %v432 = vld [vmem:[%s3] sm:$0xff]
          %v433 = vld [vmem:[%s3 + $0x8] sm:$0xff]
          %v434 = vld [vmem:[%s3 + $0x10] sm:$0xff]
          %v435 = vld [vmem:[%s3 + $0x18] sm:$0xff]
          %v436 = vld [vmem:[%s3 + $0x20] sm:$0xff]
          %v437 = vld [vmem:[%s3 + $0x28] sm:$0xff]
          %v438 = vld [vmem:[%s3 + $0x30] sm:$0xff]
          %v439 = vld [vmem:[%s3 + $0x38] sm:$0xff]
          %vm440 = vcmask 64512
          %v442 = vsel %vm440, %v432, 0
          %v445 = vsel %vm440, %v433, 0
          %v448 = vsel %vm440, %v434, 0
          %v451 = vsel %vm440, %v435, 0
          %v454 = vsel %vm440, %v436, 0
          %v457 = vsel %vm440, %v437, 0
          %v460 = vsel %vm440, %v438, 0
          %v463 = vsel %vm440, %v439, 0
          %465 = vmatprep.subr.mxu0 0.0
          %466 = vmatpush1.msra.mxu0 %v429
          %467 = vmatprep.subr.mxu0 0.0
          %468 = vmatpush1.msra.mxu0 0.0
          %469 = vmatprep.subr.mxu0 0.0
          %470 = vmatpush1.msra.mxu0 0.0
          %471 = vmatprep.subr.mxu0 0.0
          %472 = vmatpush1.msra.mxu0 0.0
          %473 = vmatprep.subr.mxu0 0.0
          %474 = vmatpush1.msra.mxu0 0.0
          %475 = vmatprep.subr.mxu0 0.0
          %476 = vmatpush1.msra.mxu0 0.0
          %477 = vmatprep.subr.mxu0 0.0
          %478 = vmatpush1.msra.mxu0 0.0
          %479 = vmatprep.subr.mxu0 0.0
          %480 = vmatpush1.msra.mxu0 0.0
          %481 = vmatprep.subr.mxu0 0.0
          %482 = vmatpush1.msra.mxu0 0.0
          %483 = vmatprep.subr.mxu0 0.0
          %484 = vmatpush1.msra.mxu0 0.0
          %485 = vmatprep.subr.mxu0 0.0
          %486 = vmatpush1.msra.mxu0 0.0
          %487 = vmatprep.subr.mxu0 0.0
          %488 = vmatpush1.msra.mxu0 0.0
          %489 = vmatprep.subr.mxu0 0.0
          %490 = vmatpush1.msra.mxu0 0.0
          %491 = vmatprep.subr.mxu0 0.0
          %492 = vmatpush1.msra.mxu0 0.0
          %493 = vmatprep.subr.mxu0 0.0
          %494 = vmatpush1.msra.mxu0 0.0
          %495 = vmatprep.subr.mxu0 0.0
          %496 = vmatpush1.msra.mxu0 0.0
          %497 = vmatprep.subr.mxu0 0.0
          %498 = vmatpush1.msra.mxu0 0.0
          %499 = vmatprep.subr.mxu0 0.0
          %500 = vmatpush1.msra.mxu0 0.0
          %501 = vmatprep.subr.mxu0 0.0
          %502 = vmatpush1.msra.mxu0 0.0
          %503 = vmatprep.subr.mxu0 0.0
          %504 = vmatpush1.msra.mxu0 0.0
          %505 = vmatprep.subr.mxu0 0.0
          %506 = vmatpush1.msra.mxu0 0.0
          %507 = vmatprep.subr.mxu0 0.0
          %508 = vmatpush1.msra.mxu0 0.0
          %509 = vmatprep.subr.mxu0 0.0
          %510 = vmatpush1.msra.mxu0 0.0
          %511 = vmatprep.subr.mxu0 0.0
          %512 = vmatpush1.msra.mxu0 0.0
          %513 = vmatprep.subr.mxu0 0.0
          %514 = vmatpush1.msra.mxu0 0.0
          %515 = vmatprep.subr.mxu0 0.0
          %516 = vmatpush1.msra.mxu0 0.0
          %517 = vmatprep.subr.mxu0 0.0
          %518 = vmatpush1.msra.mxu0 0.0
          %519 = vmatprep.subr.mxu0 0.0
          %520 = vmatpush1.msra.mxu0 0.0
          %521 = vmatprep.subr.mxu0 0.0
          %522 = vmatpush1.msra.mxu0 0.0
          %523 = vmatprep.subr.mxu0 0.0
          %524 = vmatpush1.msra.mxu0 0.0
          %525 = vmatprep.subr.mxu0 0.0
          %526 = vmatpush1.msra.mxu0 0.0
          %527 = vmatprep.subr.mxu0 0.0
          %528 = vmatpush1.msra.mxu0 0.0
          %529 = vmatprep.mubr.f32.mxu0 0.0
          %530 = vmatmul.mubr.f32.gmra.mrb[0].mxu0 %v442
          %v531 = vpop.f32.mrb[0].mxu0
          %v532 = vadd.f32 0.0, %v531
          %v533 = vpop.f32.mrb[0].mxu0
          %534 = vmatprep.mubr.f32.mxu0 0.0
          %535 = vmatmul.mubr.f32.gmra.mrb[0].mxu0 %v445
          %v536 = vpop.f32.mrb[0].mxu0
          %v537 = vadd.f32 0.0, %v536
          %v538 = vpop.f32.mrb[0].mxu0
          %539 = vmatprep.mubr.f32.mxu0 0.0
          %540 = vmatmul.mubr.f32.gmra.mrb[0].mxu0 %v448
          %v541 = vpop.f32.mrb[0].mxu0
          %v542 = vadd.f32 0.0, %v541
          %v543 = vpop.f32.mrb[0].mxu0
          %544 = vmatprep.mubr.f32.mxu0 0.0
          %545 = vmatmul.mubr.f32.gmra.mrb[0].mxu0 %v451
          %v546 = vpop.f32.mrb[0].mxu0
          %v547 = vadd.f32 0.0, %v546
          %v548 = vpop.f32.mrb[0].mxu0
          %549 = vmatprep.mubr.f32.mxu0 0.0
          %550 = vmatmul.mubr.f32.gmra.mrb[0].mxu0 %v454
          %v551 = vpop.f32.mrb[0].mxu0
          %v552 = vadd.f32 0.0, %v551
          %v553 = vpop.f32.mrb[0].mxu0
          %554 = vmatprep.mubr.f32.mxu0 0.0
          %555 = vmatmul.mubr.f32.gmra.mrb[0].mxu0 %v457
          %v556 = vpop.f32.mrb[0].mxu0
          %v557 = vadd.f32 0.0, %v556
          %v558 = vpop.f32.mrb[0].mxu0
          %559 = vmatprep.mubr.f32.mxu0 0.0
          %560 = vmatmul.mubr.f32.gmra.mrb[0].mxu0 %v460
          %v561 = vpop.f32.mrb[0].mxu0
          %v562 = vadd.f32 0.0, %v561
          %v563 = vpop.f32.mrb[0].mxu0
          %564 = vmatprep.mubr.f32.mxu0 0.0
          %565 = vmatmul.mubr.f32.gmra.mrb[0].mxu0 %v463
          %v566 = vpop.f32.mrb[0].mxu0
          %v567 = vadd.f32 0.0, %v566
          %v568 = vpop.f32.mrb[0].mxu0
          %569 = vdwg.mxu0
          %570 = vst [vmem:[%s318] sm:$0xff] %v532
          %571 = vst [vmem:[%s318 + $0x8] sm:$0xff] %v537
          %572 = vst [vmem:[%s318 + $0x10] sm:$0xff] %v542
          %573 = vst [vmem:[%s318 + $0x18] sm:$0xff] %v547
          %574 = vst [vmem:[%s318 + $0x20] sm:$0xff] %v552
          %575 = vst [vmem:[%s318 + $0x28] sm:$0xff] %v557
          %576 = vst [vmem:[%s318 + $0x30] sm:$0xff] %v562
          %577 = vst [vmem:[%s318 + $0x38] sm:$0xff] %v567
        $region48: #{tpu_custom_call.1} parent=43 // pred_fallthru
          _
        %v578 = vld [vmem:[%s341] sm:$0xff]
        %v579 = vld [vmem:[%s341 + $0x8] sm:$0xff]
        %v580 = vld [vmem:[%s341 + $0x10] sm:$0xff]
        %v581 = vld [vmem:[%s341 + $0x18] sm:$0xff]
        %v582 = vld [vmem:[%s341 + $0x20] sm:$0xff]
        %v583 = vld [vmem:[%s341 + $0x28] sm:$0xff]
        %v584 = vld [vmem:[%s341 + $0x30] sm:$0xff]
        %v585 = vld [vmem:[%s341 + $0x38] sm:$0xff]
        %v586 = vlaneseq
        %v587 = vand.u32 %v586, 127
        %s588 = smul.u32 %s27, 8
        %v589 = vstv %s588
        %v590 = vadd.s32 %v587, %v589
        %591 = vset.pattern.permute.xlu0 0
        %592 = vperm.xlu0 %591, %v578
        %v593 = vpop.permute.xlu0 %592
        %594 = vset.pattern.permute.xlu0 0
        %595 = vperm.xlu0 %594, %v579
        %v596 = vpop.permute.xlu0 %595
        %597 = vset.pattern.permute.xlu0 0
        %598 = vperm.xlu0 %597, %v580
        %v599 = vpop.permute.xlu0 %598
        %600 = vset.pattern.permute.xlu0 0
        %601 = vperm.xlu0 %600, %v581
        %v602 = vpop.permute.xlu0 %601
        %603 = vset.pattern.permute.xlu0 0
        %604 = vperm.xlu0 %603, %v582
        %v605 = vpop.permute.xlu0 %604
        %606 = vset.pattern.permute.xlu0 0
        %607 = vperm.xlu0 %606, %v583
        %v608 = vpop.permute.xlu0 %607
        %609 = vset.pattern.permute.xlu0 0
        %610 = vperm.xlu0 %609, %v584
        %v611 = vpop.permute.xlu0 %610
        %612 = vset.pattern.permute.xlu0 0
        %613 = vperm.xlu0 %612, %v585
        %v614 = vpop.permute.xlu0 %613
        %vm615 = vcmp.eq.s32.totalorder %v593, %v590
        %vm616 = vcmp.eq.s32.totalorder %v596, %v590
        %vm617 = vcmp.eq.s32.totalorder %v599, %v590
        %vm618 = vcmp.eq.s32.totalorder %v602, %v590
        %vm619 = vcmp.eq.s32.totalorder %v605, %v590
        %vm620 = vcmp.eq.s32.totalorder %v608, %v590
        %vm621 = vcmp.eq.s32.totalorder %v611, %v590
        %vm622 = vcmp.eq.s32.totalorder %v614, %v590
        %v623 = vsel %vm615, 1.0, 0.0
        %v624 = vsel %vm616, 1.0, 0.0
        %v625 = vsel %vm617, 1.0, 0.0
        %v626 = vsel %vm618, 1.0, 0.0
        %v627 = vsel %vm619, 1.0, 0.0
        %v628 = vsel %vm620, 1.0, 0.0
        %v629 = vsel %vm621, 1.0, 0.0
        %v630 = vsel %vm622, 1.0, 0.0
        %v631 = vld [vmem:[%s318] sm:$0xff]
        %v632 = vld [vmem:[%s318 + $0x8] sm:$0xff]
        %v633 = vld [vmem:[%s318 + $0x10] sm:$0xff]
        %v634 = vld [vmem:[%s318 + $0x18] sm:$0xff]
        %v635 = vld [vmem:[%s318 + $0x20] sm:$0xff]
        %v636 = vld [vmem:[%s318 + $0x28] sm:$0xff]
        %v637 = vld [vmem:[%s318 + $0x30] sm:$0xff]
        %v638 = vld [vmem:[%s318 + $0x38] sm:$0xff]
        %v639 = vld [vmem:[%s332] sm:$0xff]
        %vm640 = vcmask 64512
        %v642 = vsel %vm640, %v623, 0
        %v645 = vsel %vm640, %v624, 0
        %v648 = vsel %vm640, %v625, 0
        %v651 = vsel %vm640, %v626, 0
        %v654 = vsel %vm640, %v627, 0
        %v657 = vsel %vm640, %v628, 0
        %v660 = vsel %vm640, %v629, 0
        %v663 = vsel %vm640, %v630, 0
        %665 = vmatprep.subr.mxu0 0.0
        %666 = vmatpush1.msra.mxu0 %v639
        %667 = vmatprep.subr.mxu0 0.0
        %668 = vmatpush1.msra.mxu0 0.0
        %669 = vmatprep.subr.mxu0 0.0
        %670 = vmatpush1.msra.mxu0 0.0
        %671 = vmatprep.subr.mxu0 0.0
        %672 = vmatpush1.msra.mxu0 0.0
        %673 = vmatprep.subr.mxu0 0.0
        %674 = vmatpush1.msra.mxu0 0.0
        %675 = vmatprep.subr.mxu0 0.0
        %676 = vmatpush1.msra.mxu0 0.0
        %677 = vmatprep.subr.mxu0 0.0
        %678 = vmatpush1.msra.mxu0 0.0
        %679 = vmatprep.subr.mxu0 0.0
        %680 = vmatpush1.msra.mxu0 0.0
        %681 = vmatprep.subr.mxu0 0.0
        %682 = vmatpush1.msra.mxu0 0.0
        %683 = vmatprep.subr.mxu0 0.0
        %684 = vmatpush1.msra.mxu0 0.0
        %685 = vmatprep.subr.mxu0 0.0
        %686 = vmatpush1.msra.mxu0 0.0
        %687 = vmatprep.subr.mxu0 0.0
        %688 = vmatpush1.msra.mxu0 0.0
        %689 = vmatprep.subr.mxu0 0.0
        %690 = vmatpush1.msra.mxu0 0.0
        %691 = vmatprep.subr.mxu0 0.0
        %692 = vmatpush1.msra.mxu0 0.0
        %693 = vmatprep.subr.mxu0 0.0
        %694 = vmatpush1.msra.mxu0 0.0
        %695 = vmatprep.subr.mxu0 0.0
        %696 = vmatpush1.msra.mxu0 0.0
        %697 = vmatprep.subr.mxu0 0.0
        %698 = vmatpush1.msra.mxu0 0.0
        %699 = vmatprep.subr.mxu0 0.0
        %700 = vmatpush1.msra.mxu0 0.0
        %701 = vmatprep.subr.mxu0 0.0
        %702 = vmatpush1.msra.mxu0 0.0
        %703 = vmatprep.subr.mxu0 0.0
        %704 = vmatpush1.msra.mxu0 0.0
        %705 = vmatprep.subr.mxu0 0.0
        %706 = vmatpush1.msra.mxu0 0.0
        %707 = vmatprep.subr.mxu0 0.0
        %708 = vmatpush1.msra.mxu0 0.0
        %709 = vmatprep.subr.mxu0 0.0
        %710 = vmatpush1.msra.mxu0 0.0
        %711 = vmatprep.subr.mxu0 0.0
        %712 = vmatpush1.msra.mxu0 0.0
        %713 = vmatprep.subr.mxu0 0.0
        %714 = vmatpush1.msra.mxu0 0.0
        %715 = vmatprep.subr.mxu0 0.0
        %716 = vmatpush1.msra.mxu0 0.0
        %717 = vmatprep.subr.mxu0 0.0
        %718 = vmatpush1.msra.mxu0 0.0
        %719 = vmatprep.subr.mxu0 0.0
        %720 = vmatpush1.msra.mxu0 0.0
        %721 = vmatprep.subr.mxu0 0.0
        %722 = vmatpush1.msra.mxu0 0.0
        %723 = vmatprep.subr.mxu0 0.0
        %724 = vmatpush1.msra.mxu0 0.0
        %725 = vmatprep.subr.mxu0 0.0
        %726 = vmatpush1.msra.mxu0 0.0
        %727 = vmatprep.subr.mxu0 0.0
        %728 = vmatpush1.msra.mxu0 0.0
        %729 = vmatprep.mubr.f32.mxu0 0.0
        %730 = vmatmul.mubr.f32.gmra.mrb[0].mxu0 %v642
        %v731 = vpop.f32.mrb[0].mxu0
        %v732 = vadd.f32 0.0, %v731
        %v733 = vpop.f32.mrb[0].mxu0
        %734 = vmatprep.mubr.f32.mxu0 0.0
        %735 = vmatmul.mubr.f32.gmra.mrb[0].mxu0 %v645
        %v736 = vpop.f32.mrb[0].mxu0
        %v737 = vadd.f32 0.0, %v736
        %v738 = vpop.f32.mrb[0].mxu0
        %739 = vmatprep.mubr.f32.mxu0 0.0
        %740 = vmatmul.mubr.f32.gmra.mrb[0].mxu0 %v648
        %v741 = vpop.f32.mrb[0].mxu0
        %v742 = vadd.f32 0.0, %v741
        %v743 = vpop.f32.mrb[0].mxu0
        %744 = vmatprep.mubr.f32.mxu0 0.0
        %745 = vmatmul.mubr.f32.gmra.mrb[0].mxu0 %v651
        %v746 = vpop.f32.mrb[0].mxu0
        %v747 = vadd.f32 0.0, %v746
        %v748 = vpop.f32.mrb[0].mxu0
        %749 = vmatprep.mubr.f32.mxu0 0.0
        %750 = vmatmul.mubr.f32.gmra.mrb[0].mxu0 %v654
        %v751 = vpop.f32.mrb[0].mxu0
        %v752 = vadd.f32 0.0, %v751
        %v753 = vpop.f32.mrb[0].mxu0
        %754 = vmatprep.mubr.f32.mxu0 0.0
        %755 = vmatmul.mubr.f32.gmra.mrb[0].mxu0 %v657
        %v756 = vpop.f32.mrb[0].mxu0
        %v757 = vadd.f32 0.0, %v756
        %v758 = vpop.f32.mrb[0].mxu0
        %759 = vmatprep.mubr.f32.mxu0 0.0
        %760 = vmatmul.mubr.f32.gmra.mrb[0].mxu0 %v660
        %v761 = vpop.f32.mrb[0].mxu0
        %v762 = vadd.f32 0.0, %v761
        %v763 = vpop.f32.mrb[0].mxu0
        %764 = vmatprep.mubr.f32.mxu0 0.0
        %765 = vmatmul.mubr.f32.gmra.mrb[0].mxu0 %v663
        %v766 = vpop.f32.mrb[0].mxu0
        %v767 = vadd.f32 0.0, %v766
        %v768 = vpop.f32.mrb[0].mxu0
        %769 = vdwg.mxu0
        %v770 = vadd.f32 %v631, %v732
        %v771 = vadd.f32 %v632, %v737
        %v772 = vadd.f32 %v633, %v742
        %v773 = vadd.f32 %v634, %v747
        %v774 = vadd.f32 %v635, %v752
        %v775 = vadd.f32 %v636, %v757
        %v776 = vadd.f32 %v637, %v762
        %v777 = vadd.f32 %v638, %v767
        %778 = vst [vmem:[%s318] sm:$0xff] %v770
        %779 = vst [vmem:[%s318 + $0x8] sm:$0xff] %v771
        %780 = vst [vmem:[%s318 + $0x10] sm:$0xff] %v772
        %781 = vst [vmem:[%s318 + $0x18] sm:$0xff] %v773
        %782 = vst [vmem:[%s318 + $0x20] sm:$0xff] %v774
        %783 = vst [vmem:[%s318 + $0x28] sm:$0xff] %v775
        %784 = vst [vmem:[%s318 + $0x30] sm:$0xff] %v776
        %785 = vst [vmem:[%s318 + $0x38] sm:$0xff] %v777
        %s786 = sand.u32 %s196, 1
        %s787 = scalar_lea.sflag [#allocation3], %s786
        %s788 = sand.u32 %s196, 1
        %s789 = smul.addr %s788, 64
        %s790 = scalar_lea.vmem [#allocation2], %s789
        // Predicated region
        $region49: #{tpu_custom_call.1} parent=43 // pred_check
          %p791 = pneg %p206
        $region50: #{tpu_custom_call.1} parent=43 // pred_check_branch
          %793 = sbr.rel (%p791) target = $region52
        $region51: #{tpu_custom_call.1} parent=43 // pred_region
          %s794 = smul.u32 8, %s26
          %s796 = ssub.s32 1024, 1024
          %797 = vsyncadd %s787, %s796
          %s798 = smul.addr %s25, 8
          %s799 = sadd.s32 %s794, %s798
          %s800 = smul.addr %s799, 128
          %s801 = scalar_lea.hbm %s6, %s800
          %s802 = sshll.u32 %s790, 4
          %s803 = int_to_ptr.vmem [resolvable:$true] %s802
          %808 = dma.vmem_to_hbm [thread:$0]  %s803, 1024, %s801, %s787, 128, 128, 8
        $region52: #{tpu_custom_call.1} parent=43 // pred_fallthru
          _
      $region44: #{tpu_custom_call.1} parent=5 // pred_fallthru
        _
      %p809 = scmp.le.s32.totalorder 2, %s15
      // Predicated region
      $region53: #{tpu_custom_call.1} parent=5 // pred_check
        %p810 = pneg %p809
      $region54: #{tpu_custom_call.1} parent=5 // pred_check_branch
        %812 = sbr.rel (%p810) target = $region56
      $region55: #{tpu_custom_call.1} parent=5 // pred_region
        %s813 = ssub.s32 %s15, 2
        // Predicated region
        $region57: #{tpu_custom_call.1} parent=55 // pred_check
          %p814 = pneg %p212
        $region58: #{tpu_custom_call.1} parent=55 // pred_check_branch
          %816 = sbr.rel (%p814) target = $region60
        $region59: #{tpu_custom_call.1} parent=55 // pred_region
          %s817 = sand.u32 %s197, 1
          %s818 = scalar_lea.sflag [#allocation3], %s817
          %s819 = sand.u32 %s197, 1
          %s820 = smul.addr %s819, 64
          %s821 = scalar_lea.vmem [#allocation2], %s820
          %822 = dma.done %s818, 1024
        $region60: #{tpu_custom_call.1} parent=55 // pred_fallthru
          _
      $region56: #{tpu_custom_call.1} parent=5 // pred_fallthru
        _
    $region6: #{tpu_custom_call.1} parent=1 // loop_footer
      %s19 = sadd.s32 1, %s15
    $region7: #{tpu_custom_call.1} parent=1 // loop_footer_branch
      %14 = sbr.rel target = $region3
    $region8: #{tpu_custom_call.1} parent=1 // loop_exit
      _
    %823 = vsyncpa [#allocation3], 1
    %s824 = scalar_lea.sflag [#allocation3], 1
    %825 = vsyncpa %s824, 1

</llo_original>
